<compile_context>
chip_gen: v5e
topology: v5e:2x2
jax: 0.10.0
libtpu: 0.0.40
codegen_flags: <defaults>
</compile_context>

<pallas_src>
import functools

import jax
import jax.numpy as jnp
import numpy as np
from jax.experimental import pallas as pl
from jax.experimental.pallas import tpu as pltpu


def _distance_kernel(support_ref, query_ref, out_ref, *, S, Q, F, N, out_pad,
                     matmul_dtype):
    eps = 1e-10
    s = support_ref[...]          # (bt, S, D) f32
    q = query_ref[...]            # (bt, Q, D) f32
    bt = s.shape[0]

    # Support-row normalization in f32. cos = q @ (s * rsqrt(||s||^2))^T is
    # algebraically identical to (q @ s^T) * rsqrt(||s||^2) but needs only one
    # MXU pass; the reduce goes to the XLU slot and rsqrt to the EUP slot.
    sum_sq = jnp.sum(s * s, axis=-1, keepdims=True)                  # (bt, S, 1)
    s_hat = s * jax.lax.rsqrt(jnp.maximum(sum_sq, eps))              # (bt, S, D)

    # Single batched MXU pass with f32 accumulation. Operands in `matmul_dtype`
    # (bf16 by default → ~2x MXU rate, half the operand bytes).
    # TODO(synk): for production S, D >= 128, present support pre-transposed as
    # (B, D, S) so the rhs contraction dim lands on sublanes and no per-tile
    # vxpose of s_hat is needed (negligible at these demo sizes).
    cos = jnp.einsum("bqd,bsd->bqs",
                     q.astype(matmul_dtype), s_hat.astype(matmul_dtype),
                     preferred_element_type=jnp.float32)             # (bt, Q, S)

    # Iterative top-N (descending) over the first F columns, kept in registers.
    # Ties are removed one position at a time (first occurrence), matching
    # torch.topk value semantics. Exact float equality is safe because cur_max
    # is taken from `vals` itself (same tensor, same rounding).
    col_iota = jax.lax.broadcasted_iota(jnp.int32, (bt, Q, F), 2)
    vals = cos[:, :, :F]
    top_cols = []
    for i in range(N):
        cur_max = jnp.max(vals, axis=-1, keepdims=True)              # (bt, Q, 1)
        top_cols.append(cur_max)
        if i + 1 < N:                                                # skip last mask
            is_max = vals == cur_max
            first_idx = jnp.min(jnp.where(is_max, col_iota, F),
                                axis=-1, keepdims=True)
            vals = jnp.where(col_iota == first_idx, -jnp.inf, vals)

    # Compose the whole (bt, Q, out_pad) output row in registers and issue ONE
    # unmasked, 128-aligned store (no zero pre-store, no per-column vst.msk).
    pieces = list(top_cols)
    if S > F:
        pieces.append(cos[:, :, F:])
    pad = out_pad - (N + (S - F))
    if pad > 0:
        pieces.append(jnp.zeros((bt, Q, pad), jnp.float32))
    row = pieces[0] if len(pieces) == 1 else jnp.concatenate(pieces, axis=-1)
    out_ref[...] = row.astype(out_ref.dtype)


def _vmem_plan():
    """(tile budget bytes, vmem_limit_bytes) per TPU generation."""
    kind = ""
    try:
        kind = jax.devices()[0].device_kind.lower()
    except Exception:
        pass
    if "v5 lite" in kind or "v5e" in kind or "v5litepod" in kind:
        return 10 << 20, 48 << 20     # v5e: default scoped is only 16 MiB
    if "v6" in kind or "trillium" in kind:
        return 48 << 20, 96 << 20     # v6e: 128 MiB physical VMEM
    if "v7" in kind:
        return 20 << 20, 44 << 20     # v7x: 64 MiB physical, keep headroom
    return 12 << 20, 32 << 20         # unknown: conservative, safe everywhere


def _plan_tiling(B, S, Q, D, out_pad, budget_bytes, min_steps=4):
    """Pick (batch_tile, grid, padded_B).

    Footprint per batch row counts the double-buffered f32 I/O blocks AND the
    in-kernel intermediates (s_hat, cos, composed output row, bf16 operands).
    The tile is additionally capped so the grid has >= min(B, min_steps) steps,
    keeping DMA/compute overlap and megacore sharding alive.
    """
    per_b = (4 * (2 * (S * D + Q * D)              # double-buffered f32 inputs
                  + 2 * Q * out_pad                # double-buffered f32 output
                  + S * D + Q * S + Q * out_pad)   # f32 intermediates
             + 2 * (S * D + Q * D))                # bf16 matmul operands
    max_bt_vmem = max(1, int(budget_bytes // max(per_b, 1)))
    steps_target = min(B, min_steps)
    bt = max(1, min(B, max_bt_vmem, pl.cdiv(B, steps_target)))
    grid = pl.cdiv(B, bt)
    return bt, grid, grid * bt


def distance_network(support_set, query_set, *, n, bshot,
                     matmul_dtype=jnp.bfloat16, batch_tile=None):
    """Pallas implementation of DistanceNetwork.forward."""
    B, S, D = support_set.shape
    Bq, Q, Dq = query_set.shape
    assert B == Bq and D == Dq
    assert n <= bshot, "top-k width n must not exceed bshot (torch.topk would raise)"
    F = bshot
    out_w = n + (S - F)
    out_pad = ((out_w + 127) // 128) * 128          # lane-dense output slab

    budget_bytes, vmem_limit = _vmem_plan()
    if batch_tile is not None:
        bt = batch_tile
        grid = pl.cdiv(B, bt)
        b_pad = grid * bt
    else:
        bt, grid, b_pad = _plan_tiling(B, S, Q, D, out_pad, budget_bytes)

    if b_pad != B:                                   # awkward B: pad, don't degrade
        extra = b_pad - B
        support_set = jnp.pad(support_set, ((0, extra), (0, 0), (0, 0)))
        query_set = jnp.pad(query_set, ((0, extra), (0, 0), (0, 0)))

    kernel = functools.partial(_distance_kernel, S=S, Q=Q, F=F, N=n,
                               out_pad=out_pad, matmul_dtype=matmul_dtype)

    out_padded = pl.pallas_call(
        kernel,
        out_shape=jax.ShapeDtypeStruct((b_pad, Q, out_pad), jnp.float32),
        grid_spec=pltpu.PrefetchScalarGridSpec(
            num_scalar_prefetch=0,
            grid=(grid,),
            in_specs=[
                pl.BlockSpec((bt, S, D), lambda b: (b, 0, 0)),
                pl.BlockSpec((bt, Q, D), lambda b: (b, 0, 0)),
            ],
            out_specs=pl.BlockSpec((bt, Q, out_pad), lambda b: (b, 0, 0)),
        ),
        compiler_params=pltpu.CompilerParams(
            dimension_semantics=("parallel",),
            vmem_limit_bytes=vmem_limit),
    )(support_set, query_set)

    # Drop batch padding and the lane padding (kernel writes zeros there).
    # TODO(synk): if downstream can consume the padded slab (or a bf16 output),
    # this XLA slice-copy can be skipped entirely.
    return out_padded[:B, :, :out_w]


def distance_network_ref(support_set, query_set, *, n, bshot):
    """Pure-JAX reference (mirrors the PyTorch forward)."""
    eps = 1e-10
    f = bshot
    sum_support = jnp.sum(support_set ** 2, axis=2)
    support_magnitude = jax.lax.rsqrt(jnp.clip(sum_support, eps, None))
    dot_product = jnp.einsum("bqd,bsd->bqs", query_set, support_set)
    cos = dot_product * support_magnitude[:, None, :]
    top_vals = jax.lax.top_k(cos[:, :, :f], n)[0]
    return jnp.concatenate([top_vals, cos[:, :, f:]], axis=2)


if __name__ == "__main__":
    # Module hyper-parameters (DistanceNetwork(n, k, q, bshot)); no learned weights.
    n, k, q_per, bshot = 3, 2, 1, 8

    B = 2          # batch of episodes
    S = 12         # number of support embeddings (first `bshot` columns get top-k)
    Q = 8          # number of query embeddings
    D = 32         # embedding dim

    key = jax.random.PRNGKey(0)
    ks, kq = jax.random.split(key)
    support = jax.random.normal(ks, (B, S, D), dtype=jnp.float32)
    query = jax.random.normal(kq, (B, Q, D), dtype=jnp.float32)

    ref = jax.block_until_ready(distance_network_ref(support, query, n=n, bshot=bshot))

    # Exact-semantics path (f32 MXU operands): tight tolerance.
    out_f32 = jax.block_until_ready(
        distance_network(support, query, n=n, bshot=bshot,
                         matmul_dtype=jnp.float32))
    np.testing.assert_allclose(np.asarray(out_f32), np.asarray(ref),
                               rtol=1e-5, atol=1e-5)

    # Default fast path (bf16 MXU operands, f32 accumulation): relaxed tolerance.
    out = jax.block_until_ready(distance_network(support, query, n=n, bshot=bshot))
    np.testing.assert_allclose(np.asarray(out), np.asarray(ref),
                               rtol=5e-2, atol=5e-2)

    print("KERNEL_OK")
</pallas_src>

<mosaic_0001>
module attributes {stable_mosaic.version = 11 : i64} {
  func.func @_distance_kernel(%arg0: i32, %arg1: memref<1x12x32xf32, #tpu.memory_space<vmem>>, %arg2: memref<1x8x32xf32, #tpu.memory_space<vmem>>, %arg3: memref<1x8x128xf32, #tpu.memory_space<vmem>>) attributes {dimension_semantics = [#tpu.dimension_semantics<parallel>], iteration_bounds = array<i64: 2>, scalar_prefetch = 0 : i64, scratch_operands = 0 : i64, tpu.core_type = #tpu.core_type<tc>, window_params = [{transform_indices = @transform_0, window_bounds = array<i64: 1, 12, 32>}, {transform_indices = @transform_1, window_bounds = array<i64: 1, 8, 32>}, {transform_indices = @transform_2, window_bounds = array<i64: 1, 8, 128>}]} {
    %c0 = arith.constant 0 : index
    %c0_0 = arith.constant 0 : index
    %c0_1 = arith.constant 0 : index
    %0 = vector.load %arg1[%c0, %c0_0, %c0_1] : memref<1x12x32xf32, #tpu.memory_space<vmem>>, vector<1x12x32xf32>
    %c0_2 = arith.constant 0 : index
    %c0_3 = arith.constant 0 : index
    %c0_4 = arith.constant 0 : index
    %1 = vector.load %arg2[%c0_2, %c0_3, %c0_4] : memref<1x8x32xf32, #tpu.memory_space<vmem>>, vector<1x8x32xf32>
    %2 = arith.mulf %0, %0 : vector<1x12x32xf32>
    %cst = arith.constant dense<0.000000e+00> : vector<1x12xf32>
    %3 = vector.multi_reduction <add>, %2, %cst [2] : vector<1x12x32xf32> to vector<1x12xf32>
    %4 = vector.shape_cast %3 : vector<1x12xf32> to vector<1x12x1xf32>
    %cst_5 = arith.constant 1.000000e-10 : f32
    %5 = vector.broadcast %cst_5 : f32 to vector<1x12x1xf32>
    %6 = arith.maximumf %4, %5 : vector<1x12x1xf32>
    %7 = math.rsqrt %6 : vector<1x12x1xf32>
    %8 = vector.broadcast %7 : vector<1x12x1xf32> to vector<1x12x32xf32>
    %9 = arith.mulf %0, %8 : vector<1x12x32xf32>
    "tpu.trace_start"() <{level = 10 : i32, message = "bqd,bsd->bqs"}> : () -> ()
    %cst_6 = arith.constant dense<0.000000e+00> : vector<1x8x12xf32>
    %10 = tpu.matmul %1, %9, %cst_6 {dimension_numbers = #tpu.dot_dimension_numbers<[2], [2], [1], [1], [0, 0, 0, 1, 1, 1], [0], [0]>} : vector<1x8x32xf32>, vector<1x12x32xf32>, vector<1x8x12xf32> -> vector<1x8x12xf32>
    "tpu.trace_stop"() : () -> ()
    %11 = tpu.iota {dimensions = array<i32: 2>} : vector<1x8x8xi32>
    %12 = vector.extract_strided_slice %10 {offsets = [0, 0, 0], sizes = [1, 8, 8], strides = [1, 1, 1]} : vector<1x8x12xf32> to vector<1x8x8xf32>
    %cst_7 = arith.constant dense<0xFF800000> : vector<1x8xf32>
    %13 = vector.multi_reduction <maximumf>, %12, %cst_7 [2] : vector<1x8x8xf32> to vector<1x8xf32>
    %14 = vector.shape_cast %13 : vector<1x8xf32> to vector<1x8x1xf32>
    %15 = vector.broadcast %14 : vector<1x8x1xf32> to vector<1x8x8xf32>
    %16 = arith.cmpf oeq, %12, %15 : vector<1x8x8xf32>
    %c8_i32 = arith.constant 8 : i32
    %17 = vector.broadcast %c8_i32 : i32 to vector<1x8x8xi32>
    %18 = arith.select %16, %11, %17 : vector<1x8x8xi1>, vector<1x8x8xi32>
    %cst_8 = arith.constant dense<2147483647> : vector<1x8xi32>
    %19 = vector.multi_reduction <minsi>, %18, %cst_8 [2] : vector<1x8x8xi32> to vector<1x8xi32>
    %20 = vector.shape_cast %19 : vector<1x8xi32> to vector<1x8x1xi32>
    %21 = vector.broadcast %20 : vector<1x8x1xi32> to vector<1x8x8xi32>
    %22 = arith.cmpi eq, %11, %21 : vector<1x8x8xi32>
    %cst_9 = arith.constant 0xFF800000 : f32
    %23 = vector.broadcast %cst_9 : f32 to vector<1x8x8xf32>
    %24 = arith.select %22, %23, %12 : vector<1x8x8xi1>, vector<1x8x8xf32>
    %cst_10 = arith.constant dense<0xFF800000> : vector<1x8xf32>
    %25 = vector.multi_reduction <maximumf>, %24, %cst_10 [2] : vector<1x8x8xf32> to vector<1x8xf32>
    %26 = vector.shape_cast %25 : vector<1x8xf32> to vector<1x8x1xf32>
    %27 = vector.broadcast %26 : vector<1x8x1xf32> to vector<1x8x8xf32>
    %28 = arith.cmpf oeq, %24, %27 : vector<1x8x8xf32>
    %c8_i32_11 = arith.constant 8 : i32
    %29 = vector.broadcast %c8_i32_11 : i32 to vector<1x8x8xi32>
    %30 = arith.select %28, %11, %29 : vector<1x8x8xi1>, vector<1x8x8xi32>
    %cst_12 = arith.constant dense<2147483647> : vector<1x8xi32>
    %31 = vector.multi_reduction <minsi>, %30, %cst_12 [2] : vector<1x8x8xi32> to vector<1x8xi32>
    %32 = vector.shape_cast %31 : vector<1x8xi32> to vector<1x8x1xi32>
    %33 = vector.broadcast %32 : vector<1x8x1xi32> to vector<1x8x8xi32>
    %34 = arith.cmpi eq, %11, %33 : vector<1x8x8xi32>
    %cst_13 = arith.constant 0xFF800000 : f32
    %35 = vector.broadcast %cst_13 : f32 to vector<1x8x8xf32>
    %36 = arith.select %34, %35, %24 : vector<1x8x8xi1>, vector<1x8x8xf32>
    %cst_14 = arith.constant dense<0xFF800000> : vector<1x8xf32>
    %37 = vector.multi_reduction <maximumf>, %36, %cst_14 [2] : vector<1x8x8xf32> to vector<1x8xf32>
    %38 = vector.shape_cast %37 : vector<1x8xf32> to vector<1x8x1xf32>
    %39 = vector.extract_strided_slice %10 {offsets = [0, 0, 8], sizes = [1, 8, 4], strides = [1, 1, 1]} : vector<1x8x12xf32> to vector<1x8x4xf32>
    %cst_15 = arith.constant 0.000000e+00 : f32
    %40 = vector.broadcast %cst_15 : f32 to vector<1x8x121xf32>
    %41 = tpu.concatenate %14, %26, %38, %39, %40 in 2 : vector<1x8x1xf32>, vector<1x8x1xf32>, vector<1x8x1xf32>, vector<1x8x4xf32>, vector<1x8x121xf32> -> vector<1x8x128xf32>
    %c0_16 = arith.constant 0 : index
    %c0_17 = arith.constant 0 : index
    %c0_18 = arith.constant 0 : index
    %42 = vector.load %arg3[%c0_16, %c0_17, %c0_18] : memref<1x8x128xf32, #tpu.memory_space<vmem>>, vector<1x8x128xf32>
    tpu.vector_store %arg3[%c0_16, %c0_17, %c0_18], %41 {strides = array<i32>} : memref<1x8x128xf32, #tpu.memory_space<vmem>>, vector<1x8x128xf32>,
    return
  }
  func.func @transform_0(%arg0: i32) -> (i32, i32, i32) {
    %c0_i32 = arith.constant 0 : i32
    %c0_i32_0 = arith.constant 0 : i32
    %c0_i32_1 = arith.constant 0 : i32
    return %arg0, %c0_i32, %c0_i32_0 : i32, i32, i32
  }
  func.func @transform_1(%arg0: i32) -> (i32, i32, i32) {
    %c0_i32 = arith.constant 0 : i32
    %c0_i32_0 = arith.constant 0 : i32
    %c0_i32_1 = arith.constant 0 : i32
    return %arg0, %c0_i32, %c0_i32_0 : i32, i32, i32
  }
  func.func @transform_2(%arg0: i32) -> (i32, i32, i32) {
    %c0_i32 = arith.constant 0 : i32
    %c0_i32_0 = arith.constant 0 : i32
    %c0_i32_1 = arith.constant 0 : i32
    return %arg0, %c0_i32, %c0_i32_0 : i32, i32, i32
  }
}

</mosaic_0001>

<llo_original>
// kernel: tpu_custom_call.1
$region0: #{tpu_custom_call.1}
  #allocation0 [shape = 'u32[]', space=smem, size = 0x4, offset = 0x4, fixed_abs, tag = 'smem constant byte address 0x4 - core index']
  #allocation1 [shape = 'u32[72,128]{1,0:T(1,128)}', space=vmem, size = 0x9000, scoped, tag = 'internal scratch']
  %s0 = inlined_call_operand.vmem [shape: f32[2,12,32], index: 0, kind: input, shape index: {}]
  %s1 = inlined_call_operand.vmem [shape: f32[2,8,32], index: 1, kind: input, shape index: {}]
  %s2 = inlined_call_operand.hbm [shape: f32[2,8,128], index: 2, kind: output, shape index: {}]
  %s3 = sld [smem:[#allocation0]]
  $region41: #{tpu_custom_call.1} parent=0
    _
  %s5 = ssub.s32 1, %s3
  %s6 = scalar_select 0, %s5, %s3
  $region1: #{tpu_custom_call.1} parent=0
    #allocation2 [shape = 'u8[8192]{0}', space=vmem, size = 0x2000, scoped, tag = 'output window, operand 0']
    #allocation3 [shape = 's32[2]{0}', space=sflag, size = 0x8, scoped, tag = 'scoped memory for tpu_custom_call.1']
    %7 = vsyncpa [#allocation3], 0
    %s8 = scalar_lea.sflag [#allocation3], 1
    %9 = vsyncpa %s8, 0
    loop: start=0, step=1, limit=4
    $region2: #{tpu_custom_call.1} parent=1 // loop_pre_header
      _
    $region3: #{tpu_custom_call.1} parent=1 // loop_header
      %s11 = sphi 0, %s15
      %p12 = scmp.ge.s32.totalorder %s11, 4
      %s21 = sphi 0, %s23
      %s24 = sphi 0, %s21
      %s25 = sphi 0, %s24
      %s41 = sphi 0, %s25
      %s47 = sphi 0, %s49
      %s50 = sphi 0, %s47
      %s51 = sphi 0, %s50
      %s67 = sphi 0, %s51
      %s73 = sphi 0, %s75
      %s76 = sphi 0, %s73
      %s77 = sphi 0, %s76
      %s93 = sphi 0, %s77
    $region4: #{tpu_custom_call.1} parent=1 // loop_header_branch
      %14 = sbr.rel (%p12) target = $region8
    $region5: #{tpu_custom_call.1} parent=1 // loop_body
      %s16 = ssub.s32 %s11, 1
      %s17 = ssub.s32 %s11, 2
      %s18 = sadd.s32 %s11, 1
      %s19 = ssub.s32 %s11, %s18
      %p20 = scmp.eq.s32.totalorder %s19, 0
      %s22 = sadd.s32 %s21, 1
      %s23 = scalar_select %p20, %s21, %s22
      %p26 = pneg %p20
      %p27 = scmp.eq.s32.totalorder %s11, 1
      %p28 = por %p26, %p27
      %p29 = scmp.ne.s32.totalorder %s21, %s24
      %p30 = scmp.eq.s32.totalorder %s11, 0
      %p31 = por %p29, %p30
      %p32 = scmp.ne.s32.totalorder %s21, %s24
      %p33 = scmp.eq.s32.totalorder %s16, 1
      %p34 = por %p32, %p33
      %p35 = scmp.ne.s32.totalorder %s24, %s25
      %p36 = scmp.eq.s32.totalorder %s16, 0
      %p37 = por %p35, %p36
      %p38 = scmp.ne.s32.totalorder %s24, %s25
      %p39 = scmp.eq.s32.totalorder %s17, 1
      %p40 = por %p38, %p39
      %p42 = scmp.ne.s32.totalorder %s25, %s41
      %p43 = scmp.eq.s32.totalorder %s17, 0
      %p44 = por %p42, %p43
      %s45 = ssub.s32 %s11, %s18
      %p46 = scmp.eq.s32.totalorder %s45, 0
      %s48 = sadd.s32 %s47, 1
      %s49 = scalar_select %p46, %s47, %s48
      %p52 = pneg %p46
      %p53 = scmp.eq.s32.totalorder %s11, 1
      %p54 = por %p52, %p53
      %p55 = scmp.ne.s32.totalorder %s47, %s50
      %p56 = scmp.eq.s32.totalorder %s11, 0
      %p57 = por %p55, %p56
      %p58 = scmp.ne.s32.totalorder %s47, %s50
      %p59 = scmp.eq.s32.totalorder %s16, 1
      %p60 = por %p58, %p59
      %p61 = scmp.ne.s32.totalorder %s50, %s51
      %p62 = scmp.eq.s32.totalorder %s16, 0
      %p63 = por %p61, %p62
      %p64 = scmp.ne.s32.totalorder %s50, %s51
      %p65 = scmp.eq.s32.totalorder %s17, 1
      %p66 = por %p64, %p65
      %p68 = scmp.ne.s32.totalorder %s51, %s67
      %p69 = scmp.eq.s32.totalorder %s17, 0
      %p70 = por %p68, %p69
      %s71 = ssub.s32 %s11, %s18
      %p72 = scmp.eq.s32.totalorder %s71, 0
      %s74 = sadd.s32 %s73, 1
      %s75 = scalar_select %p72, %s73, %s74
      %p78 = pneg %p72
      %p79 = scmp.eq.s32.totalorder %s11, 1
      %p80 = por %p78, %p79
      %p81 = scmp.ne.s32.totalorder %s73, %s76
      %p82 = scmp.eq.s32.totalorder %s11, 0
      %p83 = por %p81, %p82
      %p84 = scmp.ne.s32.totalorder %s73, %s76
      %p85 = scmp.eq.s32.totalorder %s16, 1
      %p86 = por %p84, %p85
      %p87 = scmp.ne.s32.totalorder %s76, %s77
      %p88 = scmp.eq.s32.totalorder %s16, 0
      %p89 = por %p87, %p88
      %p90 = scmp.ne.s32.totalorder %s76, %s77
      %p91 = scmp.eq.s32.totalorder %s17, 1
      %p92 = por %p90, %p91
      %p94 = scmp.ne.s32.totalorder %s77, %s93
      %p95 = scmp.eq.s32.totalorder %s17, 0
      %p96 = por %p94, %p95
      %p97 = scmp.le.s32.totalorder 1, %s11
      %p98 = scmp.lt.s32.totalorder %s11, 3
      %p99 = pnand %p97, %p98
      %p100 = pneg %p99
      // Predicated region
      $region9: #{tpu_custom_call.1} parent=5 // pred_check
        _
      $region10: #{tpu_custom_call.1} parent=5 // pred_check_branch
        %102 = sbr.rel (%p99) target = $region12
      $region11: #{tpu_custom_call.1} parent=5 // pred_region
        %s103 = ssub.s32 %s11, 1
      $region12: #{tpu_custom_call.1} parent=5 // pred_fallthru
        _
      %p104 = scmp.lt.s32.totalorder %s11, 2
      // Predicated region
      $region13: #{tpu_custom_call.1} parent=5 // pred_check
        %p105 = pneg %p104
      $region14: #{tpu_custom_call.1} parent=5 // pred_check_branch
        %107 = sbr.rel (%p105) target = $region16
      $region15: #{tpu_custom_call.1} parent=5 // pred_region
        // Predicated region
        $region17: #{tpu_custom_call.1} parent=15 // pred_check
          %p108 = pneg %p31
        $region18: #{tpu_custom_call.1} parent=15 // pred_check_branch
          %110 = sbr.rel (%p108) target = $region20
        $region19: #{tpu_custom_call.1} parent=15 // pred_region
          %p111 = scmp.lt.s32.totalorder %s11, 1
          %s112 = scalar_select %p111, %s11, 1
          %s113 = smul.addr %s112, 2
          %s114 = smul.addr %s113, 8
          %s115 = scalar_lea.vmem %s0, %s114
        $region20: #{tpu_custom_call.1} parent=15 // pred_fallthru
          _
        // Predicated region
        $region21: #{tpu_custom_call.1} parent=15 // pred_check
          %p116 = pneg %p57
        $region22: #{tpu_custom_call.1} parent=15 // pred_check_branch
          %118 = sbr.rel (%p116) target = $region24
        $region23: #{tpu_custom_call.1} parent=15 // pred_region
          %p119 = scmp.lt.s32.totalorder %s11, 1
          %s120 = scalar_select %p119, %s11, 1
          %s121 = smul.addr %s120, 8
          %s122 = scalar_lea.vmem %s1, %s121
        $region24: #{tpu_custom_call.1} parent=15 // pred_fallthru
          _
      $region16: #{tpu_custom_call.1} parent=5 // pred_fallthru
        _
      %p123 = scmp.le.s32.totalorder 1, %s11
      %p124 = scmp.lt.s32.totalorder %s11, 3
      %p125 = pnand %p123, %p124
      %p126 = pneg %p125
      // Predicated region
      $region25: #{tpu_custom_call.1} parent=5 // pred_check
        _
      $region26: #{tpu_custom_call.1} parent=5 // pred_check_branch
        %128 = sbr.rel (%p125) target = $region28
      $region27: #{tpu_custom_call.1} parent=5 // pred_region
        %s129 = ssub.s32 %s11, 1
        %p130 = scmp.lt.s32.totalorder %s16, 1
        %s131 = scalar_select %p130, %s16, 1
        %s132 = smul.addr %s131, 2
        %s133 = smul.addr %s132, 8
        %s134 = scalar_lea.vmem %s0, %s133
        %p135 = pneg %p37
        %p136 = pneg %p34
        %p137 = scmp.lt.s32.totalorder %s16, 1
        %s138 = scalar_select %p137, %s16, 1
        %s139 = smul.addr %s138, 8
        %s140 = scalar_lea.vmem %s1, %s139
        %p141 = pneg %p63
        %p142 = pneg %p60
        %p143 = pneg %p89
        %p144 = pneg %p86
        %s145 = sand.u32 %s76, 1
        %s146 = scalar_lea.sflag [#allocation3], %s145
        %s147 = sand.u32 %s76, 1
        %s148 = smul.addr %s147, 8
        %s149 = scalar_lea.vmem [#allocation2], %s148
        %p150 = scmp.lt.s32.totalorder %s16, 1
        %s151 = scalar_select %p150, %s16, 1
        %s152 = smul.addr %s151, 2
        %s153 = smul.addr %s152, 8
        %s154 = scalar_lea.vmem %s0, %s153
        %p155 = scmp.lt.s32.totalorder %s16, 1
        %s156 = scalar_select %p155, %s16, 1
        %s157 = smul.addr %s156, 8
        %s158 = scalar_lea.vmem %s1, %s157
        %v159 = vld [vmem:[%s154] sm:$0xff]
        %v160 = vld [vmem:[%s154 + $0x8] sm:$0xf]
        %v161 = vld [vmem:[%s158] sm:$0xff]
        %v162 = vmul.f32 %v159, %v159
        %v163 = vmul.f32 %v160, %v160
        %vm164 = vcmask 261120
        %v165 = vsel %vm164, %v162, 0.0
        %166 = vadd.xlane.f32.xlu0 %v165
        %v167 = vpop.xlane.xlu0 %166
        %vm168 = vcmask 257024
        %v169 = vsel %vm168, %v163, 0.0
        %170 = vadd.xlane.f32.xlu0 %v169
        %v171 = vpop.xlane.xlu0 %170
        %v172 = vmax.f32 %v167, 1e-10
        %v173 = vmax.f32 %v171, 1e-10
        %v174 = vrsqrt.pop %v172
        %v175 = vmul.f32 %v174, %v172
        %v176 = vmul.f32 %v175, %v174
        %v177 = vmul.f32 0.5, %v176
        %v178 = vsub.f32 1.5, %v177
        %v179 = vmul.f32 %v174, %v178
        %vm180 = vweird.f32 %v172
        %vm181 = vweird.f32 %v174
        %vm182 = vmor %vm180, %vm181
        %v183 = vsel %vm182, %v174, %v179
        %v184 = vrsqrt.pop %v173
        %v185 = vmul.f32 %v184, %v173
        %v186 = vmul.f32 %v185, %v184
        %v187 = vmul.f32 0.5, %v186
        %v188 = vsub.f32 1.5, %v187
        %v189 = vmul.f32 %v184, %v188
        %vm190 = vweird.f32 %v173
        %vm191 = vweird.f32 %v184
        %vm192 = vmor %vm190, %vm191
        %v193 = vsel %vm192, %v184, %v189
        %v194 = vmul.f32 %v159, %v183
        %v195 = vmul.f32 %v160, %v193
        %v197 = vsel %vm164, %v161, 0
        %v200 = vsel %vm164, %v194, 0
        %v203 = vsel %vm164, %v195, 0
        %205 = vmatpush.xpose.msra.mxu0 0.0
        %206 = vmatpush.xpose.msra.mxu0 0.0
        %207 = vmatpush.xpose.msra.mxu0 0.0
        %208 = vmatpush.xpose.msra.mxu0 0.0
        %209 = vmatpush.xpose.msra.mxu0 0.0
        %210 = vmatpush.xpose.msra.mxu0 0.0
        %211 = vmatpush.xpose.msra.mxu0 0.0
        %212 = vmatpush.xpose.msra.mxu0 0.0
        %213 = vmatpush.xpose.msra.mxu0 0.0
        %214 = vmatpush.xpose.msra.mxu0 0.0
        %215 = vmatpush.xpose.msra.mxu0 0.0
        %216 = vmatpush.xpose.msra.mxu0 0.0
        %217 = vmatpush.xpose.msra.mxu0 0.0
        %218 = vmatpush.xpose.msra.mxu0 0.0
        %219 = vmatpush.xpose.msra.mxu0 %v203
        %220 = vmatpush.xpose.msra.mxu0 %v200
        %221 = vmatmul.f32.gmra.mxu0 %v197
        %v222 = vpop.f32.mrf.mxu0
        %v223 = vadd.f32 0.0, %v222
        %224 = vdwg.mxu0
        %v225 = vlaneseq
        %v226 = vand.u32 %v225, 127
        %vm227 = vcmask 64512
        %v228 = vsel %vm227, %v223, -inf
        %229 = vmax.xlane.f32.xlu0 %v228
        %v230 = vpop.xlane.xlu0 %229
        %vm231 = vcmp.eq.f32.partialorder %v223, %v230
        %v232 = vsel %vm231, %v226, 8
        %v233 = vsel %vm227, %v232, 2147483647
        %v234 = vand.u32 %v233, 65535
        %v235 = vshra.s32 %v233, 16
        %v236 = vcvt.s32.f32 %v234
        %v237 = vcvt.s32.f32 %v235
        %238 = vmin.xlane.f32.xlu0 %v237
        %v239 = vpop.xlane.xlu0 %238
        %vm240 = vcmp.eq.f32.partialorder %v237, %v239
        %v241 = vsel %vm240, %v236, inf
        %242 = vmin.xlane.f32.xlu0 %v241
        %v243 = vpop.xlane.xlu0 %242
        %v244 = vcvt.f32.s32 %v243
        %v245 = vcvt.f32.s32 %v239
        %v246 = vshll.u32 %v245, 16
        %v247 = vadd.s32 %v246, %v244
        %vm248 = vcmp.eq.s32.totalorder %v226, %v247
        %v249 = vsel %vm248, -inf, %v223
        %v250 = vsel %vm227, %v249, -inf
        %251 = vmax.xlane.f32.xlu0 %v250
        %v252 = vpop.xlane.xlu0 %251
        %vm253 = vcmp.eq.f32.partialorder %v249, %v252
        %v254 = vsel %vm253, %v226, 8
        %v255 = vsel %vm227, %v254, 2147483647
        %v256 = vand.u32 %v255, 65535
        %v257 = vshra.s32 %v255, 16
        %v258 = vcvt.s32.f32 %v256
        %v259 = vcvt.s32.f32 %v257
        %260 = vmin.xlane.f32.xlu0 %v259
        %v261 = vpop.xlane.xlu0 %260
        %vm262 = vcmp.eq.f32.partialorder %v259, %v261
        %v263 = vsel %vm262, %v258, inf
        %264 = vmin.xlane.f32.xlu0 %v263
        %v265 = vpop.xlane.xlu0 %264
        %v266 = vcvt.f32.s32 %v265
        %v267 = vcvt.f32.s32 %v261
        %v268 = vshll.u32 %v267, 16
        %v269 = vadd.s32 %v268, %v266
        %vm270 = vcmp.eq.s32.totalorder %v226, %v269
        %v271 = vsel %vm270, -inf, %v249
        %v272 = vsel %vm227, %v271, -inf
        %273 = vmax.xlane.f32.xlu0 %v272
        %v274 = vpop.xlane.xlu0 %273
        %276 = vrot.lane.b32.xlu0 %v223, 123
        %v277 = vpop.permute.xlu0 %276
        %vm279 = vcmask 7168
        %v280 = vsel %vm279, %v230, %v252
        %vm281 = vcmask 15360
        %v282 = vsel %vm281, %v280, %v274
        %vm283 = vcmask 23552
        %v284 = vsel %vm283, %v282, %v277
        %vm285 = vcmask 56320
        %v286 = vsel %vm285, %v284, 0.0
        %287 = vst [vmem:[%s149] sm:$0xff] %v286
        %s288 = sand.u32 %s76, 1
        %s289 = scalar_lea.sflag [#allocation3], %s288
        %s290 = sand.u32 %s76, 1
        %s291 = smul.addr %s290, 8
        %s292 = scalar_lea.vmem [#allocation2], %s291
        // Predicated region
        $region29: #{tpu_custom_call.1} parent=27 // pred_check
          %p293 = pneg %p86
        $region30: #{tpu_custom_call.1} parent=27 // pred_check_branch
          %295 = sbr.rel (%p293) target = $region32
        $region31: #{tpu_custom_call.1} parent=27 // pred_region
          %297 = vsyncadd %s289, 0
          %s298 = smul.addr %s16, 8
          %s299 = scalar_lea.hbm %s2, %s298
          %s301 = sshll.u32 %s292, 4
          %s302 = int_to_ptr.vmem [resolvable:$true] %s301
          %s303 = sshll.u32 %s299, 4
          %s304 = int_to_ptr.hbm [resolvable:$true] %s303
          %306 = dma.vmem_to_hbm [thread:$0]  %s302, 128, %s304, %s289
        $region32: #{tpu_custom_call.1} parent=27 // pred_fallthru
          _
      $region28: #{tpu_custom_call.1} parent=5 // pred_fallthru
        _
      %p307 = scmp.le.s32.totalorder 2, %s11
      // Predicated region
      $region33: #{tpu_custom_call.1} parent=5 // pred_check
        %p308 = pneg %p307
      $region34: #{tpu_custom_call.1} parent=5 // pred_check_branch
        %310 = sbr.rel (%p308) target = $region36
      $region35: #{tpu_custom_call.1} parent=5 // pred_region
        %s311 = ssub.s32 %s11, 2
        // Predicated region
        $region37: #{tpu_custom_call.1} parent=35 // pred_check
          %p312 = pneg %p92
        $region38: #{tpu_custom_call.1} parent=35 // pred_check_branch
          %314 = sbr.rel (%p312) target = $region40
        $region39: #{tpu_custom_call.1} parent=35 // pred_region
          %s315 = sand.u32 %s77, 1
          %s316 = scalar_lea.sflag [#allocation3], %s315
          %s317 = sand.u32 %s77, 1
          %s318 = smul.addr %s317, 8
          %s319 = scalar_lea.vmem [#allocation2], %s318
          %321 = dma.done %s316, 128
        $region40: #{tpu_custom_call.1} parent=35 // pred_fallthru
          _
      $region36: #{tpu_custom_call.1} parent=5 // pred_fallthru
        _
    $region6: #{tpu_custom_call.1} parent=1 // loop_footer
      %s15 = sadd.s32 1, %s11
    $region7: #{tpu_custom_call.1} parent=1 // loop_footer_branch
      %10 = sbr.rel target = $region3
    $region8: #{tpu_custom_call.1} parent=1 // loop_exit
      _
    %322 = vsyncpa [#allocation3], 1
    %s323 = scalar_lea.sflag [#allocation3], 1
    %324 = vsyncpa %s323, 1

</llo_original>
